<compile_context>
chip_gen: v7x
topology: tpu7x:2x2x1
jax: 0.10.0
libtpu: 0.0.40
codegen_flags: <defaults>
</compile_context>

<pallas_src>
import jax
import jax.numpy as jnp
from jax.experimental import pallas as pl
from jax.experimental.pallas import tpu as pltpu


# ----------------------------- Pallas kernel ------------------------------
def gemm_bias_kernel(x_ref, p_ref, o_ref):
    """o = x @ w + b, with w/b packed row-wise into p = [w; b].

    x_ref: (M, K) f32
    p_ref: (K + M, N) f32   rows [0:K] = mat2, rows [K:K+M] = bias
    o_ref: (M, N) f32

    The contraction is a short static unroll of broadcast-multiply-adds on the
    VPU (no MXU involvement) -- cheapest path for K=4, N=5 on all of
    v5e / v6e / v7x.
    """
    M, K = x_ref.shape
    x = x_ref[...]            # (M, K)
    p = p_ref[...]            # (K+M, N)
    w = p[:K, :]              # (K, N)  static slice
    b = p[K:, :]              # (M, N)  static slice

    acc = b                   # bias add fused as the accumulator init
    for k in range(K):        # K = 4, fully unrolled at trace time
        acc = acc + x[:, k:k + 1] * w[k:k + 1, :]
    o_ref[...] = acc


def _tile_padded_bytes(shape, itemsize=4):
    """Bytes actually moved for a 2-D f32 operand after (8,128) tile padding."""
    rows, cols = shape
    prows = ((rows + 7) // 8) * 8
    pcols = ((cols + 127) // 128) * 128
    return prows * pcols * itemsize


def gemm_addmm_packed(x, params, *, force_pallas=True):
    """Computes x @ mat2 + bias with mat2/bias pre-packed into `params`.

    x:      (M, K) float32
    params: (K + M, N) float32  == concat([mat2, bias], axis=0)
    """
    M, K = x.shape
    KM, N = params.shape
    assert KM == K + M, "params must be concat([mat2 (K,N), bias (M,N)], axis=0)"

    # Feedback #1: at ~60 FLOPs the right production choice is to let XLA fuse
    # a plain addmm; the Pallas path is gated but forced on here so the kernel
    # itself is exercised and validated.
    if not force_pallas and (2 * M * K * N) < (1 << 20):
        return x @ params[:K, :] + params[K:, :]

    vmem_spec = pl.BlockSpec(memory_space=pltpu.MemorySpace.VMEM)

    bytes_accessed = (
        _tile_padded_bytes((M, K))
        + _tile_padded_bytes((KM, N))
        + _tile_padded_bytes((M, N))
    )

    return pl.pallas_call(
        gemm_bias_kernel,
        out_shape=jax.ShapeDtypeStruct((M, N), jnp.float32),
        in_specs=[vmem_spec, vmem_spec],
        out_specs=vmem_spec,
        cost_estimate=pl.CostEstimate(
            flops=2 * M * K * N + M * N,
            transcendentals=0,
            bytes_accessed=bytes_accessed,
        ),
    )(x, params)


# ------------------------------ Module port -------------------------------
class NetGemm:
    """JAX/Pallas port of net_Gemm with deterministic parameters."""

    def __init__(self, key):
        k1, k2 = jax.random.split(key)
        # torch.randn(4, 5) / torch.randn(3, 5) -> deterministic normals here.
        self.mat2 = jax.random.normal(k1, (4, 5), dtype=jnp.float32)
        self.bias = jax.random.normal(k2, (3, 5), dtype=jnp.float32)
        # Pack the two static parameters into a single operand (one DMA
        # instead of two at every call).
        self.params = jnp.concatenate([self.mat2, self.bias], axis=0)  # (7, 5)

    def __call__(self, inputs):
        # forward: (addmm(bias, inputs[0], mat2, beta=1, alpha=1), inputs[1])
        out0 = gemm_addmm_packed(inputs[0], self.params, force_pallas=True)
        out1 = inputs[1]  # identity pass-through (glue, no compute)
        return out0, out1


# --------------------------------- main ------------------------------------
if __name__ == "__main__":
    key = jax.random.PRNGKey(0)
    kp, kx0, kx1 = jax.random.split(key, 3)

    model = NetGemm(kp)

    # inputs[0]: (3, 4) to match addmm; inputs[1]: arbitrary pass-through (4, 3)
    x0 = jax.random.normal(kx0, (3, 4), dtype=jnp.float32)
    x1 = jax.random.normal(kx1, (4, 3), dtype=jnp.float32)

    out0, out1 = model((x0, x1))
    out0 = jax.block_until_ready(out0)
    out1 = jax.block_until_ready(out1)

    # Correctness check against plain-JAX reference.
    ref = x0 @ model.mat2 + model.bias
    assert out0.shape == (3, 5) and out0.dtype == jnp.float32
    assert jnp.allclose(out0, ref, atol=1e-5, rtol=1e-5)
    assert jnp.array_equal(out1, x1)

    print("KERNEL_OK")
</pallas_src>

<mosaic_0001>
module attributes {stable_mosaic.version = 11 : i64} {
  func.func @gemm_bias_kernel(%arg0: memref<3x4xf32, #tpu.memory_space<vmem>>, %arg1: memref<7x5xf32, #tpu.memory_space<vmem>>, %arg2: memref<3x5xf32, #tpu.memory_space<vmem>>) attributes {dimension_semantics = [], scalar_prefetch = 0 : i64, scratch_operands = 0 : i64, tpu.core_type = #tpu.core_type<tc>} {
    %c0 = arith.constant 0 : index
    %c0_0 = arith.constant 0 : index
    %0 = vector.load %arg0[%c0, %c0_0] : memref<3x4xf32, #tpu.memory_space<vmem>>, vector<3x4xf32>
    %c0_1 = arith.constant 0 : index
    %c0_2 = arith.constant 0 : index
    %1 = vector.load %arg1[%c0_1, %c0_2] : memref<7x5xf32, #tpu.memory_space<vmem>>, vector<7x5xf32>
    %2 = vector.extract_strided_slice %1 {offsets = [0, 0], sizes = [4, 5], strides = [1, 1]} : vector<7x5xf32> to vector<4x5xf32>
    %3 = vector.extract_strided_slice %1 {offsets = [4, 0], sizes = [3, 5], strides = [1, 1]} : vector<7x5xf32> to vector<3x5xf32>
    %4 = vector.extract_strided_slice %0 {offsets = [0, 0], sizes = [3, 1], strides = [1, 1]} : vector<3x4xf32> to vector<3x1xf32>
    %5 = vector.extract_strided_slice %2 {offsets = [0, 0], sizes = [1, 5], strides = [1, 1]} : vector<4x5xf32> to vector<1x5xf32>
    %6 = vector.broadcast %4 : vector<3x1xf32> to vector<3x5xf32>
    %7 = vector.broadcast %5 : vector<1x5xf32> to vector<3x5xf32>
    %8 = arith.mulf %6, %7 : vector<3x5xf32>
    %9 = arith.addf %3, %8 : vector<3x5xf32>
    %10 = vector.extract_strided_slice %0 {offsets = [0, 1], sizes = [3, 1], strides = [1, 1]} : vector<3x4xf32> to vector<3x1xf32>
    %11 = vector.extract_strided_slice %2 {offsets = [1, 0], sizes = [1, 5], strides = [1, 1]} : vector<4x5xf32> to vector<1x5xf32>
    %12 = vector.broadcast %10 : vector<3x1xf32> to vector<3x5xf32>
    %13 = vector.broadcast %11 : vector<1x5xf32> to vector<3x5xf32>
    %14 = arith.mulf %12, %13 : vector<3x5xf32>
    %15 = arith.addf %9, %14 : vector<3x5xf32>
    %16 = vector.extract_strided_slice %0 {offsets = [0, 2], sizes = [3, 1], strides = [1, 1]} : vector<3x4xf32> to vector<3x1xf32>
    %17 = vector.extract_strided_slice %2 {offsets = [2, 0], sizes = [1, 5], strides = [1, 1]} : vector<4x5xf32> to vector<1x5xf32>
    %18 = vector.broadcast %16 : vector<3x1xf32> to vector<3x5xf32>
    %19 = vector.broadcast %17 : vector<1x5xf32> to vector<3x5xf32>
    %20 = arith.mulf %18, %19 : vector<3x5xf32>
    %21 = arith.addf %15, %20 : vector<3x5xf32>
    %22 = vector.extract_strided_slice %0 {offsets = [0, 3], sizes = [3, 1], strides = [1, 1]} : vector<3x4xf32> to vector<3x1xf32>
    %23 = vector.extract_strided_slice %2 {offsets = [3, 0], sizes = [1, 5], strides = [1, 1]} : vector<4x5xf32> to vector<1x5xf32>
    %24 = vector.broadcast %22 : vector<3x1xf32> to vector<3x5xf32>
    %25 = vector.broadcast %23 : vector<1x5xf32> to vector<3x5xf32>
    %26 = arith.mulf %24, %25 : vector<3x5xf32>
    %27 = arith.addf %21, %26 : vector<3x5xf32>
    %c0_3 = arith.constant 0 : index
    %c0_4 = arith.constant 0 : index
    %28 = vector.load %arg2[%c0_3, %c0_4] : memref<3x5xf32, #tpu.memory_space<vmem>>, vector<3x5xf32>
    tpu.vector_store %arg2[%c0_3, %c0_4], %27 {strides = array<i32>} : memref<3x5xf32, #tpu.memory_space<vmem>>, vector<3x5xf32>,
    return
  }
}

</mosaic_0001>

<llo_original>
// kernel: tpu_custom_call.1
$region0: #{tpu_custom_call.1}
  #allocation0 [shape = 'u32[]', space=smem, size = 0x4, offset = 0x4, fixed_abs, tag = 'smem constant byte address 0x4 - core index']
  #allocation1 [shape = 'u32[144,128]{1,0:T(1,128)}', space=vmem, size = 0x12000, scoped, tag = 'internal scratch']
  %s0 = inlined_call_operand.hbm [shape: f32[3,4], index: 0, kind: input, shape index: {}]
  %s1 = inlined_call_operand.hbm [shape: f32[7,5], index: 1, kind: input, shape index: {}]
  %s2 = inlined_call_operand.hbm [shape: f32[3,5], index: 2, kind: output, shape index: {}]
  %s3 = sld [smem:[#allocation0]]
  $region26: #{tpu_custom_call.1} parent=0
    _
  %s5 = ssub.s32 1, %s3
  %s6 = scalar_select 0, %s5, %s3
  $region1: #{tpu_custom_call.1} parent=0
    #allocation2 [shape = 'u8[2048]{0}', space=vmem, size = 0x800, scoped, tag = 'input window, operand 0, single buffered']
    #allocation3 [shape = 's32[1]{0}', space=sflag, size = 0x4, scoped, tag = 'scoped memory for tpu_custom_call.1']
    #allocation4 [shape = 's32[1]{0}', space=sflag, size = 0x4, scoped, tag = 'scoped memory for tpu_custom_call.1']
    #allocation5 [shape = 'u8[4096]{0}', space=vmem, size = 0x1000, scoped, tag = 'input window, operand 1, single buffered']
    #allocation6 [shape = 's32[1]{0}', space=sflag, size = 0x4, scoped, tag = 'scoped memory for tpu_custom_call.1']
    #allocation7 [shape = 'u8[2048]{0}', space=vmem, size = 0x800, scoped, tag = 'output window, operand 0, single buffered']
    %7 = vsyncpa [#allocation3], 0
    %8 = vsyncpa [#allocation6], 0
    %9 = vsyncpa [#allocation4], 0
    // Predicated region
    $region2: #{tpu_custom_call.1} parent=1 // pred_check
      _
    $region3: #{tpu_custom_call.1} parent=1 // pred_check_branch
      %11 = sbr.rel (0) target = $region5
    $region4: #{tpu_custom_call.1} parent=1 // pred_region
      %s13 = ssub.s32 64, 64
      %14 = vsyncadd [#allocation3], %s13
      %s16 = sshll.u32 [#allocation2], 4
      %s17 = int_to_ptr.vmem [resolvable:$true] %s16
      %19 = dma.hbm_to_vmem [thread:$0]  %s0, 64, %s17, [#allocation3]
    $region5: #{tpu_custom_call.1} parent=1 // pred_fallthru
      _
    // Predicated region
    $region6: #{tpu_custom_call.1} parent=1 // pred_check
      _
    $region7: #{tpu_custom_call.1} parent=1 // pred_check_branch
      %21 = sbr.rel (0) target = $region9
    $region8: #{tpu_custom_call.1} parent=1 // pred_region
      %s23 = ssub.s32 128, 128
      %24 = vsyncadd [#allocation6], %s23
      %s26 = sshll.u32 [#allocation5], 4
      %s27 = int_to_ptr.vmem [resolvable:$true] %s26
      %29 = dma.hbm_to_vmem [thread:$0]  %s1, 128, %s27, [#allocation6]
    $region9: #{tpu_custom_call.1} parent=1 // pred_fallthru
      _
    // Predicated region
    $region10: #{tpu_custom_call.1} parent=1 // pred_check
      _
    $region11: #{tpu_custom_call.1} parent=1 // pred_check_branch
      %31 = sbr.rel (0) target = $region13
    $region12: #{tpu_custom_call.1} parent=1 // pred_region
      %32 = dma.done [#allocation3], 64
    $region13: #{tpu_custom_call.1} parent=1 // pred_fallthru
      _
    // Predicated region
    $region14: #{tpu_custom_call.1} parent=1 // pred_check
      _
    $region15: #{tpu_custom_call.1} parent=1 // pred_check_branch
      %34 = sbr.rel (0) target = $region17
    $region16: #{tpu_custom_call.1} parent=1 // pred_region
      %35 = dma.done [#allocation6], 128
    $region17: #{tpu_custom_call.1} parent=1 // pred_fallthru
      _
    %v36 = vld [vmem:[#allocation2] sm:$0x7]
    %v37 = vld [vmem:[#allocation5] sm:$0x7f]
    %39 = vset.pattern.permute.xlu0 0
    %40 = vperm.xlu0 %39, %v36
    %v41 = vpop.permute.xlu0 %40
    %v43 = vlaneseq
    %v44 = vshrl.u32 %v43, 7
    %v45 = vsub.s32 0, %v44
    %v46 = vrot.slane %v37, %v45
    %v47 = vmul.f32 %v41, %v46
    %v49 = vrot.slane %v47, 4
    %v51 = vadd.f32 %v37, %v49
    %52 = vset.pattern.permute.xlu0 1
    %53 = vperm.xlu0 %52, %v36
    %v54 = vpop.permute.xlu0 %53
    %v56 = vlaneseq
    %v57 = vshrl.u32 %v56, 7
    %v58 = vsub.s32 1, %v57
    %v59 = vrot.slane %v37, %v58
    %v60 = vmul.f32 %v54, %v59
    %v62 = vrot.slane %v60, 4
    %v64 = vadd.f32 %v51, %v62
    %65 = vset.pattern.permute.xlu0 2
    %66 = vperm.xlu0 %65, %v36
    %v67 = vpop.permute.xlu0 %66
    %v69 = vlaneseq
    %v70 = vshrl.u32 %v69, 7
    %v71 = vsub.s32 2, %v70
    %v72 = vrot.slane %v37, %v71
    %v73 = vmul.f32 %v67, %v72
    %v75 = vrot.slane %v73, 4
    %v77 = vadd.f32 %v64, %v75
    %78 = vset.pattern.permute.xlu0 3
    %79 = vperm.xlu0 %78, %v36
    %v80 = vpop.permute.xlu0 %79
    %v82 = vlaneseq
    %v83 = vshrl.u32 %v82, 7
    %v84 = vsub.s32 3, %v83
    %v85 = vrot.slane %v37, %v84
    %v86 = vmul.f32 %v80, %v85
    %v88 = vrot.slane %v86, 4
    %v90 = vadd.f32 %v77, %v88
    %vm91 = vcmask 38916
    %92 = vst.msk [vmem:[#allocation7 - $0x4] sm:$0x70] %vm91, %v90
    // Predicated region
    $region18: #{tpu_custom_call.1} parent=1 // pred_check
      _
    $region19: #{tpu_custom_call.1} parent=1 // pred_check_branch
      %94 = sbr.rel (0) target = $region21
    $region20: #{tpu_custom_call.1} parent=1 // pred_region
      %s96 = ssub.s32 64, 64
      %97 = vsyncadd [#allocation4], %s96
      %s99 = sshll.u32 [#allocation7], 4
      %s100 = int_to_ptr.vmem [resolvable:$true] %s99
      %102 = dma.vmem_to_hbm [thread:$0]  %s100, 64, %s2, [#allocation4]
    $region21: #{tpu_custom_call.1} parent=1 // pred_fallthru
      _
    // Predicated region
    $region22: #{tpu_custom_call.1} parent=1 // pred_check
      _
    $region23: #{tpu_custom_call.1} parent=1 // pred_check_branch
      %104 = sbr.rel (0) target = $region25
    $region24: #{tpu_custom_call.1} parent=1 // pred_region
      %105 = dma.done [#allocation4], 64
    $region25: #{tpu_custom_call.1} parent=1 // pred_fallthru
      _
    %106 = vsyncpa [#allocation3], 1
    %107 = vsyncpa [#allocation6], 1
    %108 = vsyncpa [#allocation4], 1

</llo_original>
